<compile_context>
chip_gen: v6e
topology: v6e:2x2x1
jax: 0.10.0
libtpu: 0.0.40
codegen_flags: <defaults>
</compile_context>

<pallas_src>
import math
import functools

import jax
import jax.numpy as jnp
from jax.experimental import pallas as pl
from jax.experimental.pallas import tpu as pltpu


LOG_2PI = math.log(2.0 * math.pi)
MATMUL_DTYPE = jnp.bfloat16   # MXU operand dtype; accumulation stays f32


def _round_up(n, m):
    return ((n + m - 1) // m) * m


# ----------------------------------------------------------------------------- kernel
def _actor_critic_kernel(
    action_dim,
    x_ref, noise_ref, act_ref,
    w1_ref, b1_ref, w2_ref, b2_ref, w3_ref, b3_ref,
    std_ref, inv_std_ref, sel_logp_ref, sel_logp_pi_ref,
    pi_ref, out_ref,
):
    f32 = jnp.float32

    # Fused policy+value MLP: 3 matmuls (bf16 operands, f32 accumulation).
    x = x_ref[...]                                                    # [TB, obs] bf16
    h = jnp.tanh(jnp.dot(x, w1_ref[...],
                         preferred_element_type=f32) + b1_ref[...])   # [TB, 2*h1]
    h = jnp.tanh(jnp.dot(h.astype(MATMUL_DTYPE), w2_ref[...],
                         preferred_element_type=f32) + b2_ref[...])   # [TB, 2*h2]
    y = jnp.dot(h.astype(MATMUL_DTYPE), w3_ref[...],
                preferred_element_type=f32) + b3_ref[...]             # [TB, OUT_W]
    # y: lanes [0,A) = mu, lane A = v, lanes A+1/A+2 = -lp_const, rest exactly 0.

    noise = noise_ref[...]                                            # [TB, A] f32
    act = act_ref[...]                                                # [TB, A] f32
    mu = y[:, :action_dim]                                            # [TB, A]

    # Sampled action: narrow output (writeback is only A lanes per row).
    pi_ref[...] = mu + std_ref[...] * noise

    # Diagonal-Normal log-probs on the narrow action lanes.
    # (pi - mu) * inv_std == noise, so logp_pi needs no wide math at all.
    z_a = (act - mu) * inv_std_ref[...]
    logp = -0.5 * jnp.sum(z_a * z_a, axis=-1, keepdims=True)          # [TB, 1]
    logp_pi = -0.5 * jnp.sum(noise * noise, axis=-1, keepdims=True)   # [TB, 1]

    # Lane-dense stats slab: lane A = v, lane A+1 = logp, lane A+2 = logp_pi
    # (-lp_const is already carried by b3 on those lanes).  One unmasked store;
    # lanes [0,A) carry mu and are ignored by the wrapper.
    out_ref[...] = y + logp * sel_logp_ref[...] + logp_pi * sel_logp_pi_ref[...]


# ----------------------------------------------------------------------------- params
def init_params(key, obs_dim, hidden_sizes, action_dim):
    """nn.Linear-style init (U(-1/sqrt(in), 1/sqrt(in)) weights, zero biases),
    log_std initialized to -0.5.  Weights stored [in, out]."""
    h1, h2 = hidden_sizes
    keys = jax.random.split(key, 6)

    def linear_w(k, din, dout):
        bound = 1.0 / math.sqrt(din)
        return jax.random.uniform(k, (din, dout), jnp.float32, -bound, bound)

    return {
        "p_w1": linear_w(keys[0], obs_dim, h1), "p_b1": jnp.zeros((1, h1), jnp.float32),
        "p_w2": linear_w(keys[1], h1, h2),      "p_b2": jnp.zeros((1, h2), jnp.float32),
        "p_w3": linear_w(keys[2], h2, action_dim),
        "p_b3": jnp.zeros((1, action_dim), jnp.float32),
        "log_std": jnp.full((1, action_dim), -0.5, jnp.float32),
        "v_w1": linear_w(keys[3], obs_dim, h1), "v_b1": jnp.zeros((1, h1), jnp.float32),
        "v_w2": linear_w(keys[4], h1, h2),      "v_b2": jnp.zeros((1, h2), jnp.float32),
        "v_w3": linear_w(keys[5], h2, 1),       "v_b3": jnp.zeros((1, 1), jnp.float32),
    }


def pack_params(params):
    """One-time packing of policy+value weights into the fused/padded layout."""
    f32 = jnp.float32
    obs = params["p_w1"].shape[0]
    h1 = params["p_w1"].shape[1]
    h2 = params["p_w2"].shape[1]
    A = params["p_w3"].shape[1]
    out_w = _round_up(max(A + 3, 128), 128)     # mu lanes + v + logp + logp_pi, lane-dense
    # TODO(synk): optionally pad 2*h1 / 2*h2 up to 128 for full-lane h vregs on v5e.

    w1 = jnp.concatenate([params["p_w1"], params["v_w1"]], axis=1)          # [obs, 2h1]
    b1 = jnp.concatenate([params["p_b1"], params["v_b1"]], axis=1)          # [1, 2h1]

    w2 = jnp.zeros((2 * h1, 2 * h2), f32)
    w2 = w2.at[:h1, :h2].set(params["p_w2"]).at[h1:, h2:].set(params["v_w2"])
    b2 = jnp.concatenate([params["p_b2"], params["v_b2"]], axis=1)          # [1, 2h2]

    log_std = params["log_std"]                                             # [1, A]
    lp_const = jnp.sum(log_std) + 0.5 * A * LOG_2PI

    w3 = jnp.zeros((2 * h2, out_w), f32)
    w3 = w3.at[:h2, :A].set(params["p_w3"]).at[h2:, A:A + 1].set(params["v_w3"])
    b3 = jnp.zeros((1, out_w), f32)
    b3 = b3.at[:, :A].set(params["p_b3"]).at[:, A:A + 1].set(params["v_b3"])
    # Fold -lp_const into the layer-3 bias at the logp / logp_pi lanes.
    b3 = b3.at[:, A + 1].set(-lp_const).at[:, A + 2].set(-lp_const)

    lane = jnp.arange(out_w)
    sel_logp = (lane == A + 1).astype(f32).reshape(1, out_w)
    sel_logp_pi = (lane == A + 2).astype(f32).reshape(1, out_w)

    return {
        "w1": w1.astype(MATMUL_DTYPE), "b1": b1,
        "w2": w2.astype(MATMUL_DTYPE), "b2": b2,
        "w3": w3.astype(MATMUL_DTYPE), "b3": b3,
        "std": jnp.exp(log_std), "inv_std": jnp.exp(-log_std),        # [1, A] each
        "sel_logp": sel_logp, "sel_logp_pi": sel_logp_pi,             # [1, out_w]
        "out_w": out_w, "action_dim": A, "obs_dim": obs,
    }


# ----------------------------------------------------------------------------- wrapper
def actor_critic_forward(x, noise, action_taken, packed, *, tile_b=None):
    """Fused ActorCritic forward.

    x:            [B, obs_dim] float32
    noise:        [B, A] float32 standard-normal noise (Normal.sample())
    action_taken: [B, A] float32
    packed:       output of pack_params()
    returns (pi [B,A], logp [B], logp_pi [B], v [B])
    """
    B, obs_dim = x.shape
    A = packed["action_dim"]
    OUT_W = packed["out_w"]

    if tile_b is None:
        # Up to 1024 rows per tile (well under VMEM on every generation, incl.
        # v7x's 64 MiB); aim for >=2 grid steps so both v7x TensorCores get work;
        # 16-sublane granularity keeps the bf16 x blocks tile-aligned.
        tile_b = min(1024, max(16, _round_up(-(-B // 2), 16)))
    assert tile_b % 16 == 0, "tile_b must be a multiple of 16 sublanes"
    B_pad = _round_up(B, tile_b)
    assert B_pad % tile_b == 0
    pad_b = B_pad - B

    def pad_rows(a):
        return jnp.pad(a, ((0, pad_b), (0, 0))) if pad_b else a

    x_p = pad_rows(x).astype(MATMUL_DTYPE)   # bf16 on host: half the x stream
    noise_p = pad_rows(noise)                # natural [B, A] width (no lane padding)
    act_p = pad_rows(action_taken)

    grid = (B_pad // tile_b,)

    def batch_spec(width):
        return pl.BlockSpec((tile_b, width), lambda i: (i, 0))

    def const_spec(shape):
        return pl.BlockSpec(shape, lambda i: (0, 0))   # all constants are 2-D

    h1x2 = packed["w1"].shape[1]
    h2x2 = packed["w2"].shape[1]

    const_names = ("w1", "b1", "w2", "b2", "w3", "b3",
                   "std", "inv_std", "sel_logp", "sel_logp_pi")
    const_arrays = [packed[k] for k in const_names]

    bytes_accessed = int(
        sum(int(a.size) * a.dtype.itemsize for a in const_arrays)
        + x_p.size * x_p.dtype.itemsize
        + noise_p.size * 4 + act_p.size * 4              # narrow [B, A] streams
        + B_pad * A * 4 + B_pad * OUT_W * 4)             # pi + stats-slab writeback
    cost = pl.CostEstimate(
        flops=int(2 * B_pad * (obs_dim * h1x2 + h1x2 * h2x2 + h2x2 * OUT_W)),
        transcendentals=int(B_pad * (h1x2 + h2x2)),
        bytes_accessed=bytes_accessed)

    pi_pad, slab = pl.pallas_call(
        functools.partial(_actor_critic_kernel, A),
        out_shape=(jax.ShapeDtypeStruct((B_pad, A), jnp.float32),
                   jax.ShapeDtypeStruct((B_pad, OUT_W), jnp.float32)),
        grid=grid,
        in_specs=[
            batch_spec(obs_dim),                 # x (bf16)
            batch_spec(A),                       # noise, natural width
            batch_spec(A),                       # action_taken, natural width
            *[const_spec(a.shape) for a in const_arrays],
        ],
        out_specs=(batch_spec(A),                # pi (narrow)
                   batch_spec(OUT_W)),           # v / logp / logp_pi slab
        compiler_params=pltpu.CompilerParams(
            dimension_semantics=("parallel",)),  # v7x: shard batch tiles over 2 TCs
        cost_estimate=cost,
    )(x_p, noise_p, act_p, *const_arrays)

    pi = pi_pad[:B]
    v = slab[:B, A]
    logp = slab[:B, A + 1]
    logp_pi = slab[:B, A + 2]
    return pi, logp, logp_pi, v


# ----------------------------------------------------------------------------- reference
def _reference_forward(x, noise, action_taken, p, matmul_dtype=jnp.float32):
    """Pure-JAX reference.  matmul_dtype=bfloat16 mirrors the kernel's dtype
    policy exactly; matmul_dtype=float32 is the original module's math."""
    def mm(u, w):
        return jnp.dot(u.astype(matmul_dtype), w.astype(matmul_dtype),
                       preferred_element_type=jnp.float32)

    h = jnp.tanh(mm(x, p["p_w1"]) + p["p_b1"])
    h = jnp.tanh(mm(h, p["p_w2"]) + p["p_b2"])
    mu = mm(h, p["p_w3"]) + p["p_b3"]

    log_std = p["log_std"]
    std = jnp.exp(log_std)
    inv_std = jnp.exp(-log_std)
    A = mu.shape[-1]
    pi = mu + std * noise
    lp_const = jnp.sum(log_std) + 0.5 * A * LOG_2PI

    def lp(a):
        z = (a - mu) * inv_std
        return -0.5 * jnp.sum(z * z, axis=-1) - lp_const

    vh = jnp.tanh(mm(x, p["v_w1"]) + p["v_b1"])
    vh = jnp.tanh(mm(vh, p["v_w2"]) + p["v_b2"])
    v = (mm(vh, p["v_w3"]) + p["v_b3"])[:, 0]
    return pi, lp(action_taken), lp(pi), v


if __name__ == "__main__":
    B, OBS, HIDDEN, ACT = 8, 16, (32, 32), 4

    key = jax.random.PRNGKey(0)
    k_param, k_x, k_noise, k_act = jax.random.split(key, 4)

    params = init_params(k_param, OBS, HIDDEN, ACT)
    packed = pack_params(params)

    x = jax.random.normal(k_x, (B, OBS), jnp.float32)
    noise = jax.random.normal(k_noise, (B, ACT), jnp.float32)      # Normal.sample() noise
    action_taken = jax.random.normal(k_act, (B, ACT), jnp.float32)

    pi, logp, logp_pi, v = jax.block_until_ready(
        actor_critic_forward(x, noise, action_taken, packed))

    assert pi.shape == (B, ACT) and logp.shape == (B,)
    assert logp_pi.shape == (B,) and v.shape == (B,)

    # Tight check vs a reference that mirrors the kernel's bf16-operand / f32-accum
    # matmul policy (should agree to float32 rounding).
    ref_bf16 = _reference_forward(x, noise, action_taken, params,
                                  matmul_dtype=MATMUL_DTYPE)
    for got, want in zip((pi, logp, logp_pi, v), ref_bf16):
        assert jnp.allclose(got, want, atol=1e-4), "mismatch vs dtype-matched reference"

    # Loose sanity check vs the pure-f32 module math (bf16 operands lose mantissa).
    ref_f32 = _reference_forward(x, noise, action_taken, params,
                                 matmul_dtype=jnp.float32)
    for got, want in zip((pi, logp, logp_pi, v), ref_f32):
        assert jnp.allclose(got, want, atol=0.3), "semantic mismatch vs f32 reference"

    print("KERNEL_OK")
</pallas_src>

<mosaic_0001>
module attributes {stable_mosaic.version = 11 : i64} {
  func.func @_actor_critic_kernel(%arg0: i32, %arg1: memref<16x16xbf16, #tpu.memory_space<vmem>>, %arg2: memref<16x4xf32, #tpu.memory_space<vmem>>, %arg3: memref<16x4xf32, #tpu.memory_space<vmem>>, %arg4: memref<16x64xbf16, #tpu.memory_space<vmem>>, %arg5: memref<1x64xf32, #tpu.memory_space<vmem>>, %arg6: memref<64x64xbf16, #tpu.memory_space<vmem>>, %arg7: memref<1x64xf32, #tpu.memory_space<vmem>>, %arg8: memref<64x128xbf16, #tpu.memory_space<vmem>>, %arg9: memref<1x128xf32, #tpu.memory_space<vmem>>, %arg10: memref<1x4xf32, #tpu.memory_space<vmem>>, %arg11: memref<1x4xf32, #tpu.memory_space<vmem>>, %arg12: memref<1x128xf32, #tpu.memory_space<vmem>>, %arg13: memref<1x128xf32, #tpu.memory_space<vmem>>, %arg14: memref<16x4xf32, #tpu.memory_space<vmem>>, %arg15: memref<16x128xf32, #tpu.memory_space<vmem>>) attributes {dimension_semantics = [#tpu.dimension_semantics<parallel>], iteration_bounds = array<i64: 1>, scalar_prefetch = 0 : i64, scratch_operands = 0 : i64, tpu.core_type = #tpu.core_type<tc>, window_params = [{transform_indices = @transform_0, window_bounds = array<i64: 16, 16>}, {transform_indices = @transform_1, window_bounds = array<i64: 16, 4>}, {transform_indices = @transform_2, window_bounds = array<i64: 16, 4>}, {pipeline_mode = #tpu.pipeline_mode<synchronous>, transform_indices = @transform_3, window_bounds = array<i64: 16, 64>}, {pipeline_mode = #tpu.pipeline_mode<synchronous>, transform_indices = @transform_4, window_bounds = array<i64: 1, 64>}, {pipeline_mode = #tpu.pipeline_mode<synchronous>, transform_indices = @transform_5, window_bounds = array<i64: 64, 64>}, {pipeline_mode = #tpu.pipeline_mode<synchronous>, transform_indices = @transform_6, window_bounds = array<i64: 1, 64>}, {pipeline_mode = #tpu.pipeline_mode<synchronous>, transform_indices = @transform_7, window_bounds = array<i64: 64, 128>}, {pipeline_mode = #tpu.pipeline_mode<synchronous>, transform_indices = @transform_8, window_bounds = array<i64: 1, 128>}, {pipeline_mode = #tpu.pipeline_mode<synchronous>, transform_indices = @transform_9, window_bounds = array<i64: 1, 4>}, {pipeline_mode = #tpu.pipeline_mode<synchronous>, transform_indices = @transform_10, window_bounds = array<i64: 1, 4>}, {pipeline_mode = #tpu.pipeline_mode<synchronous>, transform_indices = @transform_11, window_bounds = array<i64: 1, 128>}, {pipeline_mode = #tpu.pipeline_mode<synchronous>, transform_indices = @transform_12, window_bounds = array<i64: 1, 128>}, {transform_indices = @transform_13, window_bounds = array<i64: 16, 4>}, {transform_indices = @transform_14, window_bounds = array<i64: 16, 128>}]} {
    %c0 = arith.constant 0 : index
    %c0_0 = arith.constant 0 : index
    %0 = vector.load %arg1[%c0, %c0_0] : memref<16x16xbf16, #tpu.memory_space<vmem>>, vector<16x16xbf16>
    %c0_1 = arith.constant 0 : index
    %c0_2 = arith.constant 0 : index
    %1 = vector.load %arg4[%c0_1, %c0_2] : memref<16x64xbf16, #tpu.memory_space<vmem>>, vector<16x64xbf16>
    %cst = arith.constant dense<0.000000e+00> : vector<16x64xf32>
    %2 = tpu.matmul %0, %1, %cst {dimension_numbers = #tpu.dot_dimension_numbers<[1], [0], [0], [1], [0, 0, 1, 1], [], []>} : vector<16x16xbf16>, vector<16x64xbf16>, vector<16x64xf32> -> vector<16x64xf32>
    %c0_3 = arith.constant 0 : index
    %c0_4 = arith.constant 0 : index
    %3 = vector.load %arg5[%c0_3, %c0_4] : memref<1x64xf32, #tpu.memory_space<vmem>>, vector<1x64xf32>
    %4 = vector.broadcast %3 : vector<1x64xf32> to vector<16x64xf32>
    %5 = arith.addf %2, %4 : vector<16x64xf32>
    %6 = math.tanh %5 : vector<16x64xf32>
    %7 = arith.truncf %6 : vector<16x64xf32> to vector<16x64xbf16>
    %c0_5 = arith.constant 0 : index
    %c0_6 = arith.constant 0 : index
    %8 = vector.load %arg6[%c0_5, %c0_6] : memref<64x64xbf16, #tpu.memory_space<vmem>>, vector<64x64xbf16>
    %cst_7 = arith.constant dense<0.000000e+00> : vector<16x64xf32>
    %9 = tpu.matmul %7, %8, %cst_7 {dimension_numbers = #tpu.dot_dimension_numbers<[1], [0], [0], [1], [0, 0, 1, 1], [], []>} : vector<16x64xbf16>, vector<64x64xbf16>, vector<16x64xf32> -> vector<16x64xf32>
    %c0_8 = arith.constant 0 : index
    %c0_9 = arith.constant 0 : index
    %10 = vector.load %arg7[%c0_8, %c0_9] : memref<1x64xf32, #tpu.memory_space<vmem>>, vector<1x64xf32>
    %11 = vector.broadcast %10 : vector<1x64xf32> to vector<16x64xf32>
    %12 = arith.addf %9, %11 : vector<16x64xf32>
    %13 = math.tanh %12 : vector<16x64xf32>
    %14 = arith.truncf %13 : vector<16x64xf32> to vector<16x64xbf16>
    %c0_10 = arith.constant 0 : index
    %c0_11 = arith.constant 0 : index
    %15 = vector.load %arg8[%c0_10, %c0_11] : memref<64x128xbf16, #tpu.memory_space<vmem>>, vector<64x128xbf16>
    %cst_12 = arith.constant dense<0.000000e+00> : vector<16x128xf32>
    %16 = tpu.matmul %14, %15, %cst_12 {dimension_numbers = #tpu.dot_dimension_numbers<[1], [0], [0], [1], [0, 0, 1, 1], [], []>} : vector<16x64xbf16>, vector<64x128xbf16>, vector<16x128xf32> -> vector<16x128xf32>
    %c0_13 = arith.constant 0 : index
    %c0_14 = arith.constant 0 : index
    %17 = vector.load %arg9[%c0_13, %c0_14] : memref<1x128xf32, #tpu.memory_space<vmem>>, vector<1x128xf32>
    %18 = vector.broadcast %17 : vector<1x128xf32> to vector<16x128xf32>
    %19 = arith.addf %16, %18 : vector<16x128xf32>
    %c0_15 = arith.constant 0 : index
    %c0_16 = arith.constant 0 : index
    %20 = vector.load %arg2[%c0_15, %c0_16] : memref<16x4xf32, #tpu.memory_space<vmem>>, vector<16x4xf32>
    %c0_17 = arith.constant 0 : index
    %c0_18 = arith.constant 0 : index
    %21 = vector.load %arg3[%c0_17, %c0_18] : memref<16x4xf32, #tpu.memory_space<vmem>>, vector<16x4xf32>
    %22 = vector.extract_strided_slice %19 {offsets = [0, 0], sizes = [16, 4], strides = [1, 1]} : vector<16x128xf32> to vector<16x4xf32>
    %c0_19 = arith.constant 0 : index
    %c0_20 = arith.constant 0 : index
    %23 = vector.load %arg10[%c0_19, %c0_20] : memref<1x4xf32, #tpu.memory_space<vmem>>, vector<1x4xf32>
    %24 = vector.broadcast %23 : vector<1x4xf32> to vector<16x4xf32>
    %25 = arith.mulf %24, %20 : vector<16x4xf32>
    %26 = arith.addf %22, %25 : vector<16x4xf32>
    %c0_21 = arith.constant 0 : index
    %c0_22 = arith.constant 0 : index
    %27 = vector.load %arg14[%c0_21, %c0_22] : memref<16x4xf32, #tpu.memory_space<vmem>>, vector<16x4xf32>
    tpu.vector_store %arg14[%c0_21, %c0_22], %26 {strides = array<i32>} : memref<16x4xf32, #tpu.memory_space<vmem>>, vector<16x4xf32>,
    %28 = arith.subf %21, %22 : vector<16x4xf32>
    %c0_23 = arith.constant 0 : index
    %c0_24 = arith.constant 0 : index
    %29 = vector.load %arg11[%c0_23, %c0_24] : memref<1x4xf32, #tpu.memory_space<vmem>>, vector<1x4xf32>
    %30 = vector.broadcast %29 : vector<1x4xf32> to vector<16x4xf32>
    %31 = arith.mulf %28, %30 : vector<16x4xf32>
    %32 = arith.mulf %31, %31 : vector<16x4xf32>
    %cst_25 = arith.constant dense<0.000000e+00> : vector<16xf32>
    %33 = vector.multi_reduction <add>, %32, %cst_25 [1] : vector<16x4xf32> to vector<16xf32>
    %34 = vector.shape_cast %33 : vector<16xf32> to vector<16x1xf32>
    %cst_26 = arith.constant -5.000000e-01 : f32
    %35 = vector.broadcast %cst_26 : f32 to vector<16x1xf32>
    %36 = arith.mulf %35, %34 : vector<16x1xf32>
    %37 = arith.mulf %20, %20 : vector<16x4xf32>
    %cst_27 = arith.constant dense<0.000000e+00> : vector<16xf32>
    %38 = vector.multi_reduction <add>, %37, %cst_27 [1] : vector<16x4xf32> to vector<16xf32>
    %39 = vector.shape_cast %38 : vector<16xf32> to vector<16x1xf32>
    %cst_28 = arith.constant -5.000000e-01 : f32
    %40 = vector.broadcast %cst_28 : f32 to vector<16x1xf32>
    %41 = arith.mulf %40, %39 : vector<16x1xf32>
    %c0_29 = arith.constant 0 : index
    %c0_30 = arith.constant 0 : index
    %42 = vector.load %arg12[%c0_29, %c0_30] : memref<1x128xf32, #tpu.memory_space<vmem>>, vector<1x128xf32>
    %43 = vector.broadcast %36 : vector<16x1xf32> to vector<16x128xf32>
    %44 = vector.broadcast %42 : vector<1x128xf32> to vector<16x128xf32>
    %45 = arith.mulf %43, %44 : vector<16x128xf32>
    %46 = arith.addf %19, %45 : vector<16x128xf32>
    %c0_31 = arith.constant 0 : index
    %c0_32 = arith.constant 0 : index
    %47 = vector.load %arg13[%c0_31, %c0_32] : memref<1x128xf32, #tpu.memory_space<vmem>>, vector<1x128xf32>
    %48 = vector.broadcast %41 : vector<16x1xf32> to vector<16x128xf32>
    %49 = vector.broadcast %47 : vector<1x128xf32> to vector<16x128xf32>
    %50 = arith.mulf %48, %49 : vector<16x128xf32>
    %51 = arith.addf %46, %50 : vector<16x128xf32>
    %c0_33 = arith.constant 0 : index
    %c0_34 = arith.constant 0 : index
    %52 = vector.load %arg15[%c0_33, %c0_34] : memref<16x128xf32, #tpu.memory_space<vmem>>, vector<16x128xf32>
    tpu.vector_store %arg15[%c0_33, %c0_34], %51 {strides = array<i32>} : memref<16x128xf32, #tpu.memory_space<vmem>>, vector<16x128xf32>,
    return
  }
  func.func @transform_0(%arg0: i32) -> (i32, i32) {
    %c0_i32 = arith.constant 0 : i32
    %c0_i32_0 = arith.constant 0 : i32
    return %arg0, %c0_i32 : i32, i32
  }
  func.func @transform_1(%arg0: i32) -> (i32, i32) {
    %c0_i32 = arith.constant 0 : i32
    %c0_i32_0 = arith.constant 0 : i32
    return %arg0, %c0_i32 : i32, i32
  }
  func.func @transform_2(%arg0: i32) -> (i32, i32) {
    %c0_i32 = arith.constant 0 : i32
    %c0_i32_0 = arith.constant 0 : i32
    return %arg0, %c0_i32 : i32, i32
  }
  func.func @transform_3(%arg0: i32) -> (i32, i32) {
    %c0_i32 = arith.constant 0 : i32
    %c0_i32_0 = arith.constant 0 : i32
    %c0_i32_1 = arith.constant 0 : i32
    return %c0_i32, %c0_i32_0 : i32, i32
  }
  func.func @transform_4(%arg0: i32) -> (i32, i32) {
    %c0_i32 = arith.constant 0 : i32
    %c0_i32_0 = arith.constant 0 : i32
    %c0_i32_1 = arith.constant 0 : i32
    return %c0_i32, %c0_i32_0 : i32, i32
  }
  func.func @transform_5(%arg0: i32) -> (i32, i32) {
    %c0_i32 = arith.constant 0 : i32
    %c0_i32_0 = arith.constant 0 : i32
    %c0_i32_1 = arith.constant 0 : i32
    return %c0_i32, %c0_i32_0 : i32, i32
  }
  func.func @transform_6(%arg0: i32) -> (i32, i32) {
    %c0_i32 = arith.constant 0 : i32
    %c0_i32_0 = arith.constant 0 : i32
    %c0_i32_1 = arith.constant 0 : i32
    return %c0_i32, %c0_i32_0 : i32, i32
  }
  func.func @transform_7(%arg0: i32) -> (i32, i32) {
    %c0_i32 = arith.constant 0 : i32
    %c0_i32_0 = arith.constant 0 : i32
    %c0_i32_1 = arith.constant 0 : i32
    return %c0_i32, %c0_i32_0 : i32, i32
  }
  func.func @transform_8(%arg0: i32) -> (i32, i32) {
    %c0_i32 = arith.constant 0 : i32
    %c0_i32_0 = arith.constant 0 : i32
    %c0_i32_1 = arith.constant 0 : i32
    return %c0_i32, %c0_i32_0 : i32, i32
  }
  func.func @transform_9(%arg0: i32) -> (i32, i32) {
    %c0_i32 = arith.constant 0 : i32
    %c0_i32_0 = arith.constant 0 : i32
    %c0_i32_1 = arith.constant 0 : i32
    return %c0_i32, %c0_i32_0 : i32, i32
  }
  func.func @transform_10(%arg0: i32) -> (i32, i32) {
    %c0_i32 = arith.constant 0 : i32
    %c0_i32_0 = arith.constant 0 : i32
    %c0_i32_1 = arith.constant 0 : i32
    return %c0_i32, %c0_i32_0 : i32, i32
  }
  func.func @transform_11(%arg0: i32) -> (i32, i32) {
    %c0_i32 = arith.constant 0 : i32
    %c0_i32_0 = arith.constant 0 : i32
    %c0_i32_1 = arith.constant 0 : i32
    return %c0_i32, %c0_i32_0 : i32, i32
  }
  func.func @transform_12(%arg0: i32) -> (i32, i32) {
    %c0_i32 = arith.constant 0 : i32
    %c0_i32_0 = arith.constant 0 : i32
    %c0_i32_1 = arith.constant 0 : i32
    return %c0_i32, %c0_i32_0 : i32, i32
  }
  func.func @transform_13(%arg0: i32) -> (i32, i32) {
    %c0_i32 = arith.constant 0 : i32
    %c0_i32_0 = arith.constant 0 : i32
    return %arg0, %c0_i32 : i32, i32
  }
  func.func @transform_14(%arg0: i32) -> (i32, i32) {
    %c0_i32 = arith.constant 0 : i32
    %c0_i32_0 = arith.constant 0 : i32
    return %arg0, %c0_i32 : i32, i32
  }
}

</mosaic_0001>

<llo_original>
// kernel: tpu_custom_call.1
$region0: #{tpu_custom_call.1}
  #allocation0 [shape = 'u32[]', space=smem, size = 0x4, offset = 0x4, fixed_abs, tag = 'smem constant byte address 0x4 - core index']
  #allocation1 [shape = 'u32[144,128]{1,0:T(1,128)}', space=vmem, size = 0x12000, scoped, tag = 'internal scratch']
  %s0 = inlined_call_operand.vmem [shape: bf16[16,16], index: 0, kind: input, shape index: {}]
  %s1 = inlined_call_operand.vmem [shape: f32[16,4], index: 1, kind: input, shape index: {}]
  %s2 = inlined_call_operand.vmem [shape: f32[16,4], index: 2, kind: input, shape index: {}]
  %s3 = inlined_call_operand.vmem [shape: bf16[16,64], index: 3, kind: input, shape index: {}]
  %s4 = inlined_call_operand.vmem [shape: f32[1,64], index: 4, kind: input, shape index: {}]
  %s5 = inlined_call_operand.vmem [shape: bf16[64,64], index: 5, kind: input, shape index: {}]
  %s6 = inlined_call_operand.vmem [shape: f32[1,64], index: 6, kind: input, shape index: {}]
  %s7 = inlined_call_operand.hbm [shape: bf16[64,128], index: 7, kind: input, shape index: {}]
  %s8 = inlined_call_operand.vmem [shape: f32[1,128], index: 8, kind: input, shape index: {}]
  %s9 = inlined_call_operand.vmem [shape: f32[1,4], index: 9, kind: input, shape index: {}]
  %s10 = inlined_call_operand.vmem [shape: f32[1,4], index: 10, kind: input, shape index: {}]
  %s11 = inlined_call_operand.vmem [shape: f32[1,128], index: 11, kind: input, shape index: {}]
  %s12 = inlined_call_operand.vmem [shape: f32[1,128], index: 12, kind: input, shape index: {}]
  %s13 = inlined_call_operand.vmem [shape: f32[16,4], index: 13, kind: output, shape index: {0}]
  %s14 = inlined_call_operand.hbm [shape: f32[16,128], index: 14, kind: output, shape index: {1}]
  %15 = xla_tuple %s13, %s14
  %s16 = sld [smem:[#allocation0]]
  $region74: #{tpu_custom_call.1} parent=0
    _
  %s18 = ssub.s32 1, %s16
  %s19 = scalar_select 0, %s18, %s16
  $region1: #{tpu_custom_call.1} parent=0
    #allocation2 [shape = 'u8[16384]{0}', space=vmem, size = 0x4000, scoped, tag = 'input window, operand 7, single buffered']
    #allocation3 [shape = 's32[1]{0}', space=sflag, size = 0x4, scoped, tag = 'scoped memory for tpu_custom_call.1']
    #allocation4 [shape = 's32[1]{0}', space=sflag, size = 0x4, scoped, tag = 'scoped memory for tpu_custom_call.1']
    #allocation5 [shape = 'u8[8192]{0}', space=vmem, size = 0x2000, scoped, tag = 'output window, operand 1, single buffered']
    %20 = vsyncpa [#allocation3], 0
    %21 = vsyncpa [#allocation4], 0
    // Predicated region
    $region2: #{tpu_custom_call.1} parent=1 // pred_check
      _
    $region3: #{tpu_custom_call.1} parent=1 // pred_check_branch
      %23 = sbr.rel (0) target = $region5
    $region4: #{tpu_custom_call.1} parent=1 // pred_region
      _
    $region5: #{tpu_custom_call.1} parent=1 // pred_fallthru
      _
    // Predicated region
    $region6: #{tpu_custom_call.1} parent=1 // pred_check
      _
    $region7: #{tpu_custom_call.1} parent=1 // pred_check_branch
      %25 = sbr.rel (0) target = $region9
    $region8: #{tpu_custom_call.1} parent=1 // pred_region
      _
    $region9: #{tpu_custom_call.1} parent=1 // pred_fallthru
      _
    // Predicated region
    $region10: #{tpu_custom_call.1} parent=1 // pred_check
      _
    $region11: #{tpu_custom_call.1} parent=1 // pred_check_branch
      %27 = sbr.rel (0) target = $region13
    $region12: #{tpu_custom_call.1} parent=1 // pred_region
      _
    $region13: #{tpu_custom_call.1} parent=1 // pred_fallthru
      _
    // Predicated region
    $region14: #{tpu_custom_call.1} parent=1 // pred_check
      _
    $region15: #{tpu_custom_call.1} parent=1 // pred_check_branch
      %29 = sbr.rel (0) target = $region17
    $region16: #{tpu_custom_call.1} parent=1 // pred_region
      _
    $region17: #{tpu_custom_call.1} parent=1 // pred_fallthru
      _
    // Predicated region
    $region18: #{tpu_custom_call.1} parent=1 // pred_check
      _
    $region19: #{tpu_custom_call.1} parent=1 // pred_check_branch
      %31 = sbr.rel (0) target = $region21
    $region20: #{tpu_custom_call.1} parent=1 // pred_region
      _
    $region21: #{tpu_custom_call.1} parent=1 // pred_fallthru
      _
    // Predicated region
    $region22: #{tpu_custom_call.1} parent=1 // pred_check
      _
    $region23: #{tpu_custom_call.1} parent=1 // pred_check_branch
      %33 = sbr.rel (0) target = $region25
    $region24: #{tpu_custom_call.1} parent=1 // pred_region
      _
    $region25: #{tpu_custom_call.1} parent=1 // pred_fallthru
      _
    // Predicated region
    $region26: #{tpu_custom_call.1} parent=1 // pred_check
      _
    $region27: #{tpu_custom_call.1} parent=1 // pred_check_branch
      %35 = sbr.rel (0) target = $region29
    $region28: #{tpu_custom_call.1} parent=1 // pred_region
      _
    $region29: #{tpu_custom_call.1} parent=1 // pred_fallthru
      _
    // Predicated region
    $region30: #{tpu_custom_call.1} parent=1 // pred_check
      _
    $region31: #{tpu_custom_call.1} parent=1 // pred_check_branch
      %37 = sbr.rel (0) target = $region33
    $region32: #{tpu_custom_call.1} parent=1 // pred_region
      %s39 = ssub.s32 512, 512
      %40 = vsyncadd [#allocation3], %s39
      %s41 = sshll.u32 [#allocation2], 4
      %s42 = int_to_ptr.vmem [resolvable:$true] %s41
      %47 = dma.hbm_to_vmem [thread:$0]  %s7, 512, %s42, [#allocation3], 64, 64, 4
    $region33: #{tpu_custom_call.1} parent=1 // pred_fallthru
      _
    // Predicated region
    $region34: #{tpu_custom_call.1} parent=1 // pred_check
      _
    $region35: #{tpu_custom_call.1} parent=1 // pred_check_branch
      %49 = sbr.rel (0) target = $region37
    $region36: #{tpu_custom_call.1} parent=1 // pred_region
      _
    $region37: #{tpu_custom_call.1} parent=1 // pred_fallthru
      _
    // Predicated region
    $region38: #{tpu_custom_call.1} parent=1 // pred_check
      _
    $region39: #{tpu_custom_call.1} parent=1 // pred_check_branch
      %51 = sbr.rel (0) target = $region41
    $region40: #{tpu_custom_call.1} parent=1 // pred_region
      _
    $region41: #{tpu_custom_call.1} parent=1 // pred_fallthru
      _
    // Predicated region
    $region42: #{tpu_custom_call.1} parent=1 // pred_check
      _
    $region43: #{tpu_custom_call.1} parent=1 // pred_check_branch
      %53 = sbr.rel (0) target = $region45
    $region44: #{tpu_custom_call.1} parent=1 // pred_region
      _
    $region45: #{tpu_custom_call.1} parent=1 // pred_fallthru
      _
    // Predicated region
    $region46: #{tpu_custom_call.1} parent=1 // pred_check
      _
    $region47: #{tpu_custom_call.1} parent=1 // pred_check_branch
      %55 = sbr.rel (0) target = $region49
    $region48: #{tpu_custom_call.1} parent=1 // pred_region
      _
    $region49: #{tpu_custom_call.1} parent=1 // pred_fallthru
      _
    // Predicated region
    $region50: #{tpu_custom_call.1} parent=1 // pred_check
      _
    $region51: #{tpu_custom_call.1} parent=1 // pred_check_branch
      %57 = sbr.rel (0) target = $region53
    $region52: #{tpu_custom_call.1} parent=1 // pred_region
      _
    $region53: #{tpu_custom_call.1} parent=1 // pred_fallthru
      _
    // Predicated region
    $region54: #{tpu_custom_call.1} parent=1 // pred_check
      _
    $region55: #{tpu_custom_call.1} parent=1 // pred_check_branch
      %59 = sbr.rel (0) target = $region57
    $region56: #{tpu_custom_call.1} parent=1 // pred_region
      %60 = dma.done [#allocation3], 512
    $region57: #{tpu_custom_call.1} parent=1 // pred_fallthru
      _
    %v62 = vld [vmem:[%s0] sm:$0xf]
    %v63 = vld [vmem:[%s0 + $0x4] sm:$0xf]
    %v64 = vld [vmem:[%s3] sm:$0xf]
    %v65 = vld [vmem:[%s3 + $0x4] sm:$0xf]
    %v66 = vld [vmem:[%s4] sm:$0x1]
    %v68 = vlaneseq
    %v69 = vshrl.u32 %v68, 7
    %v70 = vsub.s32 0, %v69
    %v71 = vrot.slane %v66, %v70
    %v75 = vunpack.c.l.b16 %v62
    %v76 = vunpack.c.l.b16 %v63
    %v77 = vpack.c.b16 %v76, %v75
    %v80 = vunpack.c.l.b16 %v64
    %v81 = vunpack.c.l.b16 %v65
    %v82 = vpack.c.b16 %v81, %v80
    %vm84 = vcmask 130048
    %v86 = vsel %vm84, %v77, 0
    %88 = vmatprep.subr.bf16.mxu0 0
    %89 = vmatpush1.bf16.msra.mxu0 0
    %90 = vmatprep.subr.bf16.mxu0 0
    %91 = vmatpush1.bf16.msra.mxu0 0
    %92 = vmatprep.subr.bf16.mxu0 0
    %93 = vmatpush1.bf16.msra.mxu0 0
    %94 = vmatprep.subr.bf16.mxu0 0
    %95 = vmatpush1.bf16.msra.mxu0 0
    %96 = vmatprep.subr.bf16.mxu0 0
    %97 = vmatpush1.bf16.msra.mxu0 0
    %98 = vmatprep.subr.bf16.mxu0 0
    %99 = vmatpush1.bf16.msra.mxu0 0
    %100 = vmatprep.subr.bf16.mxu0 0
    %101 = vmatpush1.bf16.msra.mxu0 0
    %102 = vmatprep.subr.bf16.mxu0 0
    %103 = vmatpush1.bf16.msra.mxu0 %v82
    %104 = vmatprep.subr.bf16.mxu0 0
    %105 = vmatpush2.bf16.msra.mxu0 0
    %106 = vmatprep.subr.bf16.mxu0 0
    %107 = vmatpush2.bf16.msra.mxu0 0
    %108 = vmatprep.subr.bf16.mxu0 0
    %109 = vmatpush2.bf16.msra.mxu0 0
    %110 = vmatprep.subr.bf16.mxu0 0
    %111 = vmatpush2.bf16.msra.mxu0 0
    %112 = vmatprep.subr.bf16.mxu0 0
    %113 = vmatpush2.bf16.msra.mxu0 0
    %114 = vmatprep.subr.bf16.mxu0 0
    %115 = vmatpush2.bf16.msra.mxu0 0
    %116 = vmatprep.subr.bf16.mxu0 0
    %117 = vmatpush2.bf16.msra.mxu0 0
    %118 = vmatprep.subr.bf16.mxu0 0
    %119 = vmatpush2.bf16.msra.mxu0 0
    %120 = vmatprep.mubr.bf16.mxu0 0
    %121 = vmatmul.mubr.bf16.gmra.mxu0 %v86
    %v122 = vpop.f32.mrf.mxu0
    %v123 = vadd.f32 %v71, %v122
    %v124 = vpop.f32.mrf.mxu0
    %v125 = vpop.f32.mrf.mxu0
    %v126 = vadd.f32 %v71, %v125
    %v127 = vpop.f32.mrf.mxu0
    %128 = vdwg.mxu0
    %v129 = vtanh.pop %v123
    %v130 = vtanh.pop %v126
    %v131 = vpack.c.bf16 %v130, %v129
    %v132 = vld [vmem:[%s5] sm:$0xf]
    %v133 = vld [vmem:[%s5 + $0x4] sm:$0xf]
    %v134 = vld [vmem:[%s5 + $0x8] sm:$0xf]
    %v135 = vld [vmem:[%s5 + $0xc] sm:$0xf]
    %v136 = vld [vmem:[%s5 + $0x10] sm:$0xf]
    %v137 = vld [vmem:[%s5 + $0x14] sm:$0xf]
    %v138 = vld [vmem:[%s5 + $0x18] sm:$0xf]
    %v139 = vld [vmem:[%s5 + $0x1c] sm:$0xf]
    %v140 = vld [vmem:[%s6] sm:$0x1]
    %v142 = vlaneseq
    %v143 = vshrl.u32 %v142, 7
    %v144 = vsub.s32 0, %v143
    %v145 = vrot.slane %v140, %v144
    %v155 = vunpack.c.l.b16 %v132
    %v156 = vunpack.c.l.b16 %v133
    %v157 = vunpack.c.l.b16 %v134
    %v158 = vunpack.c.l.b16 %v135
    %v159 = vunpack.c.l.b16 %v136
    %v160 = vunpack.c.l.b16 %v137
    %v161 = vunpack.c.l.b16 %v138
    %v162 = vunpack.c.l.b16 %v139
    %v163 = vpack.c.b16 %v156, %v155
    %v164 = vpack.c.b16 %v158, %v157
    %v165 = vpack.c.b16 %v160, %v159
    %v166 = vpack.c.b16 %v162, %v161
    %vm171 = vcmask 523264
    %v173 = vsel %vm171, %v131, 0
    %175 = vmatprep.subr.bf16.mxu0 0
    %176 = vmatpush1.bf16.msra.mxu0 0
    %177 = vmatprep.subr.bf16.mxu0 0
    %178 = vmatpush1.bf16.msra.mxu0 0
    %179 = vmatprep.subr.bf16.mxu0 0
    %180 = vmatpush1.bf16.msra.mxu0 0
    %181 = vmatprep.subr.bf16.mxu0 0
    %182 = vmatpush1.bf16.msra.mxu0 0
    %183 = vmatprep.subr.bf16.mxu0 0
    %184 = vmatpush1.bf16.msra.mxu0 %v166
    %185 = vmatprep.subr.bf16.mxu0 0
    %186 = vmatpush1.bf16.msra.mxu0 %v165
    %187 = vmatprep.subr.bf16.mxu0 0
    %188 = vmatpush1.bf16.msra.mxu0 %v164
    %189 = vmatprep.subr.bf16.mxu0 0
    %190 = vmatpush1.bf16.msra.mxu0 %v163
    %191 = vmatprep.subr.bf16.mxu0 0
    %192 = vmatpush2.bf16.msra.mxu0 0
    %193 = vmatprep.subr.bf16.mxu0 0
    %194 = vmatpush2.bf16.msra.mxu0 0
    %195 = vmatprep.subr.bf16.mxu0 0
    %196 = vmatpush2.bf16.msra.mxu0 0
    %197 = vmatprep.subr.bf16.mxu0 0
    %198 = vmatpush2.bf16.msra.mxu0 0
    %199 = vmatprep.subr.bf16.mxu0 0
    %200 = vmatpush2.bf16.msra.mxu0 0
    %201 = vmatprep.subr.bf16.mxu0 0
    %202 = vmatpush2.bf16.msra.mxu0 0
    %203 = vmatprep.subr.bf16.mxu0 0
    %204 = vmatpush2.bf16.msra.mxu0 0
    %205 = vmatprep.subr.bf16.mxu0 0
    %206 = vmatpush2.bf16.msra.mxu0 0
    %207 = vmatprep.mubr.bf16.mxu0 0
    %208 = vmatmul.mubr.bf16.gmra.mxu0 %v173
    %v209 = vpop.f32.mrf.mxu0
    %v210 = vadd.f32 %v145, %v209
    %v211 = vpop.f32.mrf.mxu0
    %v212 = vpop.f32.mrf.mxu0
    %v213 = vadd.f32 %v145, %v212
    %v214 = vpop.f32.mrf.mxu0
    %215 = vdwg.mxu0
    %v216 = vtanh.pop %v210
    %v217 = vtanh.pop %v213
    %v218 = vpack.c.bf16 %v217, %v216
    %v219 = vld [vmem:[#allocation2] sm:$0xf]
    %v220 = vld [vmem:[#allocation2 + $0x4] sm:$0xf]
    %v221 = vld [vmem:[#allocation2 + $0x8] sm:$0xf]
    %v222 = vld [vmem:[#allocation2 + $0xc] sm:$0xf]
    %v223 = vld [vmem:[#allocation2 + $0x10] sm:$0xf]
    %v224 = vld [vmem:[#allocation2 + $0x14] sm:$0xf]
    %v225 = vld [vmem:[#allocation2 + $0x18] sm:$0xf]
    %v226 = vld [vmem:[#allocation2 + $0x1c] sm:$0xf]
    %v227 = vld [vmem:[%s8] sm:$0x1]
    %v229 = vlaneseq
    %v230 = vshrl.u32 %v229, 7
    %v231 = vsub.s32 0, %v230
    %v232 = vrot.slane %v227, %v231
    %v242 = vunpack.c.l.b16 %v219
    %v243 = vunpack.c.l.b16 %v220
    %v244 = vunpack.c.l.b16 %v221
    %v245 = vunpack.c.l.b16 %v222
    %v246 = vunpack.c.l.b16 %v223
    %v247 = vunpack.c.l.b16 %v224
    %v248 = vunpack.c.l.b16 %v225
    %v249 = vunpack.c.l.b16 %v226
    %v250 = vpack.c.b16 %v243, %v242
    %v251 = vpack.c.b16 %v245, %v244
    %v252 = vpack.c.b16 %v247, %v246
    %v253 = vpack.c.b16 %v249, %v248
    %v259 = vsel %vm171, %v218, 0
    %261 = vmatprep.subr.bf16.mxu0 0
    %262 = vmatpush1.bf16.msra.mxu0 0
    %263 = vmatprep.subr.bf16.mxu0 0
    %264 = vmatpush1.bf16.msra.mxu0 0
    %265 = vmatprep.subr.bf16.mxu0 0
    %266 = vmatpush1.bf16.msra.mxu0 0
    %267 = vmatprep.subr.bf16.mxu0 0
    %268 = vmatpush1.bf16.msra.mxu0 0
    %269 = vmatprep.subr.bf16.mxu0 0
    %270 = vmatpush1.bf16.msra.mxu0 %v253
    %271 = vmatprep.subr.bf16.mxu0 0
    %272 = vmatpush1.bf16.msra.mxu0 %v252
    %273 = vmatprep.subr.bf16.mxu0 0
    %274 = vmatpush1.bf16.msra.mxu0 %v251
    %275 = vmatprep.subr.bf16.mxu0 0
    %276 = vmatpush1.bf16.msra.mxu0 %v250
    %277 = vmatprep.subr.bf16.mxu0 0
    %278 = vmatpush2.bf16.msra.mxu0 0
    %279 = vmatprep.subr.bf16.mxu0 0
    %280 = vmatpush2.bf16.msra.mxu0 0
    %281 = vmatprep.subr.bf16.mxu0 0
    %282 = vmatpush2.bf16.msra.mxu0 0
    %283 = vmatprep.subr.bf16.mxu0 0
    %284 = vmatpush2.bf16.msra.mxu0 0
    %285 = vmatprep.subr.bf16.mxu0 0
    %286 = vmatpush2.bf16.msra.mxu0 0
    %287 = vmatprep.subr.bf16.mxu0 0
    %288 = vmatpush2.bf16.msra.mxu0 0
    %289 = vmatprep.subr.bf16.mxu0 0
    %290 = vmatpush2.bf16.msra.mxu0 0
    %291 = vmatprep.subr.bf16.mxu0 0
    %292 = vmatpush2.bf16.msra.mxu0 0
    %293 = vmatprep.mubr.bf16.mxu0 0
    %294 = vmatmul.mubr.bf16.gmra.mxu0 %v259
    %v295 = vpop.f32.mrf.mxu0
    %v296 = vadd.f32 %v232, %v295
    %v297 = vpop.f32.mrf.mxu0
    %v298 = vpop.f32.mrf.mxu0
    %v299 = vadd.f32 %v232, %v298
    %v300 = vpop.f32.mrf.mxu0
    %301 = vdwg.mxu0
    %v302 = vld [vmem:[%s1] sm:$0xff]
    %v303 = vld [vmem:[%s1 + $0x8] sm:$0xff]
    %v304 = vld [vmem:[%s2] sm:$0xff]
    %v305 = vld [vmem:[%s2 + $0x8] sm:$0xff]
    %v306 = vld [vmem:[%s9] sm:$0x1]
    %v308 = vlaneseq
    %v309 = vshrl.u32 %v308, 7
    %v310 = vsub.s32 0, %v309
    %v311 = vrot.slane %v306, %v310
    %v313 = vmul.f32 %v311, %v302
    %v314 = vmul.f32 %v311, %v303
    %v315 = vadd.f32 %v296, %v313
    %v316 = vadd.f32 %v299, %v314
    %vm317 = vcmask 31744
    %318 = vst.msk [vmem:[%s13] sm:$0xff] %vm317, %v315
    %319 = vst.msk [vmem:[%s13 + $0x8] sm:$0xff] %vm317, %v316
    %v320 = vsub.f32 %v304, %v296
    %v321 = vsub.f32 %v305, %v299
    %v322 = vld [vmem:[%s10] sm:$0x1]
    %v324 = vlaneseq
    %v325 = vshrl.u32 %v324, 7
    %v326 = vsub.s32 0, %v325
    %v327 = vrot.slane %v322, %v326
    %v329 = vmul.f32 %v320, %v327
    %v330 = vmul.f32 %v321, %v327
    %v331 = vmul.f32 %v329, %v329
    %v332 = vmul.f32 %v330, %v330
    %v333 = vsel %vm317, %v331, 0.0
    %334 = vadd.xlane.f32.xlu0 %v333
    %v335 = vpop.xlane.xlu0 %334
    %v336 = vsel %vm317, %v332, 0.0
    %337 = vadd.xlane.f32.xlu0 %v336
    %v338 = vpop.xlane.xlu0 %337
    %v339 = vmul.f32 %v335, -0.5
    %v340 = vmul.f32 %v338, -0.5
    %v341 = vmul.f32 %v302, %v302
    %v342 = vmul.f32 %v303, %v303
    %v343 = vsel %vm317, %v341, 0.0
    %344 = vadd.xlane.f32.xlu0 %v343
    %v345 = vpop.xlane.xlu0 %344
    %v346 = vsel %vm317, %v342, 0.0
    %347 = vadd.xlane.f32.xlu0 %v346
    %v348 = vpop.xlane.xlu0 %347
    %v349 = vmul.f32 %v345, -0.5
    %v350 = vmul.f32 %v348, -0.5
    %v351 = vld [vmem:[%s11] sm:$0x1]
    %v353 = vlaneseq
    %v354 = vshrl.u32 %v353, 7
    %v355 = vsub.s32 0, %v354
    %v356 = vrot.slane %v351, %v355
    %v358 = vmul.f32 %v339, %v356
    %v359 = vmul.f32 %v340, %v356
    %v360 = vadd.f32 %v296, %v358
    %v361 = vadd.f32 %v299, %v359
    %v362 = vld [vmem:[%s12] sm:$0x1]
    %v364 = vlaneseq
    %v365 = vshrl.u32 %v364, 7
    %v366 = vsub.s32 0, %v365
    %v367 = vrot.slane %v362, %v366
    %v369 = vmul.f32 %v349, %v367
    %v370 = vmul.f32 %v350, %v367
    %v371 = vadd.f32 %v360, %v369
    %v372 = vadd.f32 %v361, %v370
    %373 = vst [vmem:[#allocation5] sm:$0xff] %v371
    %374 = vst [vmem:[#allocation5 + $0x8] sm:$0xff] %v372
    // Predicated region
    $region58: #{tpu_custom_call.1} parent=1 // pred_check
      _
    $region59: #{tpu_custom_call.1} parent=1 // pred_check_branch
      %376 = sbr.rel (0) target = $region61
    $region60: #{tpu_custom_call.1} parent=1 // pred_region
      _
    $region61: #{tpu_custom_call.1} parent=1 // pred_fallthru
      _
    // Predicated region
    $region62: #{tpu_custom_call.1} parent=1 // pred_check
      _
    $region63: #{tpu_custom_call.1} parent=1 // pred_check_branch
      %378 = sbr.rel (0) target = $region65
    $region64: #{tpu_custom_call.1} parent=1 // pred_region
      %s380 = ssub.s32 256, 256
      %381 = vsyncadd [#allocation4], %s380
      %s382 = sshll.u32 [#allocation5], 4
      %s383 = int_to_ptr.vmem [resolvable:$true] %s382
      %388 = dma.vmem_to_hbm [thread:$0]  %s383, 256, %s14, [#allocation4], 128, 128, 8
    $region65: #{tpu_custom_call.1} parent=1 // pred_fallthru
      _
    // Predicated region
    $region66: #{tpu_custom_call.1} parent=1 // pred_check
      _
    $region67: #{tpu_custom_call.1} parent=1 // pred_check_branch
      %390 = sbr.rel (0) target = $region69
    $region68: #{tpu_custom_call.1} parent=1 // pred_region
      _
    $region69: #{tpu_custom_call.1} parent=1 // pred_fallthru
      _
    // Predicated region
    $region70: #{tpu_custom_call.1} parent=1 // pred_check
      _
    $region71: #{tpu_custom_call.1} parent=1 // pred_check_branch
      %392 = sbr.rel (0) target = $region73
    $region72: #{tpu_custom_call.1} parent=1 // pred_region
      %393 = dma.done [#allocation4], 256
    $region73: #{tpu_custom_call.1} parent=1 // pred_fallthru
      _
    %394 = vsyncpa [#allocation3], 1
    %395 = vsyncpa [#allocation4], 1

</llo_original>
